<compile_context>
chip_gen: v6e
topology: v6e:2x2x1
jax: 0.10.0
libtpu: 0.0.40
codegen_flags: <defaults>
</compile_context>

<pallas_src>
import functools

import jax
import jax.numpy as jnp
import numpy as np
from jax.experimental import pallas as pl
from jax.experimental.pallas import tpu as pltpu


def linear_reduce_kernel(ft_ref, a2_ref, ssum_ref, expand_ref, fold_ref, out_ref,
                         *, exact_recip):
    # ft_ref     : [TN, K*D]   (input dtype)      lane-dense feature slab
    # a2_ref     : [TN, K*Da]  (input dtype)      lane-dense attention slab
    # ssum_ref   : [K*Da, K]   (input dtype, 0/1) sums the Da lanes of each message
    # expand_ref : [K, K*D]    (f32, 0/1)         broadcasts weight k across its D lanes
    # fold_ref   : [K*D, D]    (f32, 0/1)         sums over the K messages
    # out_ref    : [TN, D]

    # Attention logits: s[n, k] = sum_Da a2[n, k, :]   (MXU, f32 accumulation).
    s = jnp.dot(a2_ref[...], ssum_ref[...],
                preferred_element_type=jnp.float32)                 # [TN, K]
    # tanh bounds logits to [-1, 1] => exp in [1/e, e]; no max-subtraction needed.
    e = jnp.exp(jnp.tanh(s))                                        # [TN, K]   (EUP, K lanes)
    denom = jnp.sum(e, axis=-1, keepdims=True)                      # [TN, 1]   (small XLU reduce)

    # Broadcast each unnormalized weight across its D feature lanes via the MXU.
    w_exp = jnp.dot(e, expand_ref[...],
                    preferred_element_type=jnp.float32)             # [TN, K*D]
    # Weighted features: full-lane VPU multiply (upcast is register-only).
    weighted = w_exp * ft_ref[...].astype(jnp.float32)              # [TN, K*D]
    # Fold the K messages on the MXU.
    accum = jnp.dot(weighted, fold_ref[...],
                    preferred_element_type=jnp.float32)             # [TN, D]

    if exact_recip:
        inv = pl.reciprocal(denom, approx=False)   # exact: f32 parity with PyTorch
    else:
        inv = pl.reciprocal(denom, approx=True)    # EUP slot, otherwise idle
    out_ref[...] = (accum * inv).astype(out_ref.dtype)


def _round_up(x, m):
    return (x + m - 1) // m * m


def _vmem_capacity_bytes():
    try:
        cap = int(pltpu.get_tpu_info().vmem_capacity_bytes)
        if cap > 0:
            return cap
    except Exception:
        pass
    return 64 << 20   # conservative fallback: v7x physical VMEM


def _choose_node_tile(N, K, D, Da, ft_isz, a2_isz, out_isz, budget_bytes,
                      max_tile=8192):
    # Physical (lane-padded to 128) VMEM per node row; double-buffered in/out blocks.
    row_ft = _round_up(K * D, 128) * ft_isz
    row_a2 = _round_up(K * Da, 128) * a2_isz
    row_out = _round_up(D, 128) * out_isz
    per_node = 2 * (row_ft + row_a2 + row_out)
    tile = budget_bytes // max(per_node, 1)
    tile = max(8, min(int(tile), max_tile))
    n8 = _round_up(N, 8)
    tile = min(tile, n8)
    # Prefer >= 2 grid steps so v7x's two TensorCores both get a share of the
    # "parallel" node axis (no-op on single-TC v5e/v6e).
    if tile >= n8 and n8 >= 16:
        tile = _round_up(pl.cdiv(n8, 2), 8)
    return max(8, (tile // 8) * 8)


def linear_reduce(ft, a2, *, node_tile=None, vmem_block_budget_bytes=None):
    """ft: [N, K, D], a2: [N, K, Da] -> accum: [N, D] (softmax-over-K weighted sum)."""
    N, K, D = ft.shape
    Na, Ka, Da = a2.shape
    assert Na == N and Ka == K, "ft / a2 node and message dims must match"

    out_dtype = ft.dtype
    ft_isz = jnp.dtype(ft.dtype).itemsize
    a2_isz = jnp.dtype(a2.dtype).itemsize
    out_isz = jnp.dtype(out_dtype).itemsize

    vmem_cap = _vmem_capacity_bytes()
    if vmem_block_budget_bytes is None:
        # Double-buffered block budget ~60% of physical VMEM (v7x: ~38 MiB, v6e/v5e: ~77 MiB).
        vmem_block_budget_bytes = int(vmem_cap * 0.6)

    if node_tile is None:
        node_tile = _choose_node_tile(N, K, D, Da, ft_isz, a2_isz, out_isz,
                                      vmem_block_budget_bytes)

    # Lane-dense 2D views: contiguous row-major reshape is free (no extra HBM pass).
    ft2 = ft.reshape(N, K * D)
    a22 = a2.reshape(N, K * Da)

    # Tiny constant 0/1 matrices that drive the MXU reductions/broadcast.
    ssum = jnp.asarray(np.kron(np.eye(K), np.ones((Da, 1))), dtype=a2.dtype)      # [K*Da, K]
    expand = jnp.asarray(np.kron(np.eye(K), np.ones((1, D))), dtype=jnp.float32)  # [K, K*D]
    fold = jnp.asarray(np.kron(np.ones((K, 1)), np.eye(D)), dtype=jnp.float32)    # [K*D, D]

    # VMEM limit from the physical double-buffered footprint (+ headroom covering
    # the small constant matrices), capped per-chip.
    row_ft = _round_up(K * D, 128) * ft_isz
    row_a2 = _round_up(K * Da, 128) * a2_isz
    row_out = _round_up(D, 128) * out_isz
    block_bytes = node_tile * (row_ft + row_a2 + row_out)
    vmem_limit = 2 * block_bytes + (8 << 20)
    vmem_limit = int(min(max(vmem_limit, 32 << 20),
                         min(int(vmem_cap * 0.85), 100 << 20)))

    exact_recip = jnp.dtype(out_dtype) == jnp.dtype(jnp.float32)
    kernel = functools.partial(linear_reduce_kernel, exact_recip=exact_recip)

    # Ragged grid: last tile may read garbage rows (row-wise math, never mixes rows)
    # and its OOB output rows are masked, so the result is exactly [N, D]. No jnp.pad.
    grid = (pl.cdiv(N, node_tile),)
    out = pl.pallas_call(
        kernel,
        out_shape=jax.ShapeDtypeStruct((N, D), out_dtype),
        grid_spec=pltpu.PrefetchScalarGridSpec(
            num_scalar_prefetch=0,
            grid=grid,
            in_specs=[
                pl.BlockSpec((node_tile, K * D), lambda i: (i, 0)),
                pl.BlockSpec((node_tile, K * Da), lambda i: (i, 0)),
                pl.BlockSpec((K * Da, K), lambda i: (0, 0)),
                pl.BlockSpec((K, K * D), lambda i: (0, 0)),
                pl.BlockSpec((K * D, D), lambda i: (0, 0)),
            ],
            out_specs=pl.BlockSpec((node_tile, D), lambda i: (i, 0)),
        ),
        compiler_params=pltpu.CompilerParams(
            dimension_semantics=("parallel",),
            vmem_limit_bytes=vmem_limit,
        ),
    )(ft2, a22, ssum, expand, fold)
    return out


def linear_reduce_ref(ft, a2):
    """Pure-JAX reference mirroring the PyTorch module."""
    s = jnp.sum(a2, axis=-1, keepdims=True)             # [N, K, 1]
    e = jax.nn.softmax(jnp.tanh(s), axis=1)             # [N, K, 1]
    return jnp.sum(e * ft, axis=1)                      # [N, D]


if __name__ == "__main__":
    key = jax.random.PRNGKey(0)
    k_ft, k_a2, k_ft2, k_a22 = jax.random.split(key, 4)

    # Small f32 case; N deliberately NOT a multiple of 8 (exercises the ragged tile).
    N, K, D, Da = 10, 8, 32, 16   # nodes, messages-per-node, feat dim, attn dim
    ft = jax.random.normal(k_ft, (N, K, D), dtype=jnp.float32)
    a2 = jax.random.normal(k_a2, (N, K, Da), dtype=jnp.float32)

    out = jax.block_until_ready(linear_reduce(ft, a2))
    ref = linear_reduce_ref(ft, a2)
    assert out.shape == (N, D)
    assert jnp.allclose(out, ref, atol=2e-2, rtol=2e-2), "f32 mismatch vs reference"

    # bf16 inputs (halved HBM traffic on a memory-bound kernel) + multi-step ragged grid.
    N2 = 300
    ft_b = jax.random.normal(k_ft2, (N2, K, D), dtype=jnp.float32).astype(jnp.bfloat16)
    a2_b = jax.random.normal(k_a22, (N2, K, Da), dtype=jnp.float32).astype(jnp.bfloat16)
    out_b = jax.block_until_ready(linear_reduce(ft_b, a2_b))
    ref_b = linear_reduce_ref(ft_b.astype(jnp.float32), a2_b.astype(jnp.float32))
    assert out_b.shape == (N2, D)
    assert jnp.allclose(out_b.astype(jnp.float32), ref_b, atol=5e-2, rtol=5e-2), \
        "bf16 mismatch vs reference"

    print("KERNEL_OK")
</pallas_src>

<mosaic_0001>
module attributes {stable_mosaic.version = 11 : i64} {
  func.func @linear_reduce_kernel(%arg0: i32, %arg1: memref<8x256xf32, #tpu.memory_space<vmem>>, %arg2: memref<8x128xf32, #tpu.memory_space<vmem>>, %arg3: memref<128x8xf32, #tpu.memory_space<vmem>>, %arg4: memref<8x256xf32, #tpu.memory_space<vmem>>, %arg5: memref<256x32xf32, #tpu.memory_space<vmem>>, %arg6: memref<8x32xf32, #tpu.memory_space<vmem>>) attributes {dimension_semantics = [#tpu.dimension_semantics<parallel>], iteration_bounds = array<i64: 2>, scalar_prefetch = 0 : i64, scratch_operands = 0 : i64, tpu.core_type = #tpu.core_type<tc>, window_params = [{transform_indices = @transform_0, window_bounds = array<i64: 8, 256>}, {transform_indices = @transform_1, window_bounds = array<i64: 8, 128>}, {pipeline_mode = #tpu.pipeline_mode<synchronous>, transform_indices = @transform_2, window_bounds = array<i64: 128, 8>}, {pipeline_mode = #tpu.pipeline_mode<synchronous>, transform_indices = @transform_3, window_bounds = array<i64: 8, 256>}, {pipeline_mode = #tpu.pipeline_mode<synchronous>, transform_indices = @transform_4, window_bounds = array<i64: 256, 32>}, {transform_indices = @transform_5, window_bounds = array<i64: 8, 32>}]} {
    %c0 = arith.constant 0 : index
    %c0_0 = arith.constant 0 : index
    %0 = vector.load %arg2[%c0, %c0_0] : memref<8x128xf32, #tpu.memory_space<vmem>>, vector<8x128xf32>
    %c0_1 = arith.constant 0 : index
    %c0_2 = arith.constant 0 : index
    %1 = vector.load %arg3[%c0_1, %c0_2] : memref<128x8xf32, #tpu.memory_space<vmem>>, vector<128x8xf32>
    %cst = arith.constant dense<0.000000e+00> : vector<8x8xf32>
    %2 = tpu.matmul %0, %1, %cst {dimension_numbers = #tpu.dot_dimension_numbers<[1], [0], [0], [1], [0, 0, 1, 1], [], []>} : vector<8x128xf32>, vector<128x8xf32>, vector<8x8xf32> -> vector<8x8xf32>
    %3 = math.tanh %2 : vector<8x8xf32>
    %4 = math.exp %3 : vector<8x8xf32>
    %cst_3 = arith.constant dense<0.000000e+00> : vector<8xf32>
    %5 = vector.multi_reduction <add>, %4, %cst_3 [1] : vector<8x8xf32> to vector<8xf32>
    %6 = vector.shape_cast %5 : vector<8xf32> to vector<8x1xf32>
    %c0_4 = arith.constant 0 : index
    %c0_5 = arith.constant 0 : index
    %7 = vector.load %arg4[%c0_4, %c0_5] : memref<8x256xf32, #tpu.memory_space<vmem>>, vector<8x256xf32>
    %cst_6 = arith.constant dense<0.000000e+00> : vector<8x256xf32>
    %8 = tpu.matmul %4, %7, %cst_6 {dimension_numbers = #tpu.dot_dimension_numbers<[1], [0], [0], [1], [0, 0, 1, 1], [], []>} : vector<8x8xf32>, vector<8x256xf32>, vector<8x256xf32> -> vector<8x256xf32>
    %c0_7 = arith.constant 0 : index
    %c0_8 = arith.constant 0 : index
    %9 = vector.load %arg1[%c0_7, %c0_8] : memref<8x256xf32, #tpu.memory_space<vmem>>, vector<8x256xf32>
    %10 = arith.mulf %8, %9 : vector<8x256xf32>
    %c0_9 = arith.constant 0 : index
    %c0_10 = arith.constant 0 : index
    %11 = vector.load %arg5[%c0_9, %c0_10] : memref<256x32xf32, #tpu.memory_space<vmem>>, vector<256x32xf32>
    %cst_11 = arith.constant dense<0.000000e+00> : vector<8x32xf32>
    %12 = tpu.matmul %10, %11, %cst_11 {dimension_numbers = #tpu.dot_dimension_numbers<[1], [0], [0], [1], [0, 0, 1, 1], [], []>} : vector<8x256xf32>, vector<256x32xf32>, vector<8x32xf32> -> vector<8x32xf32>
    %13 = tpu.reciprocal %6 : vector<8x1xf32> -> vector<8x1xf32>
    %14 = vector.broadcast %13 : vector<8x1xf32> to vector<8x32xf32>
    %15 = arith.mulf %12, %14 : vector<8x32xf32>
    %c0_12 = arith.constant 0 : index
    %c0_13 = arith.constant 0 : index
    %16 = vector.load %arg6[%c0_12, %c0_13] : memref<8x32xf32, #tpu.memory_space<vmem>>, vector<8x32xf32>
    tpu.vector_store %arg6[%c0_12, %c0_13], %15 {strides = array<i32>} : memref<8x32xf32, #tpu.memory_space<vmem>>, vector<8x32xf32>,
    return
  }
  func.func @transform_0(%arg0: i32) -> (i32, i32) {
    %c0_i32 = arith.constant 0 : i32
    %c0_i32_0 = arith.constant 0 : i32
    return %arg0, %c0_i32 : i32, i32
  }
  func.func @transform_1(%arg0: i32) -> (i32, i32) {
    %c0_i32 = arith.constant 0 : i32
    %c0_i32_0 = arith.constant 0 : i32
    return %arg0, %c0_i32 : i32, i32
  }
  func.func @transform_2(%arg0: i32) -> (i32, i32) {
    %c0_i32 = arith.constant 0 : i32
    %c0_i32_0 = arith.constant 0 : i32
    %c0_i32_1 = arith.constant 0 : i32
    return %c0_i32, %c0_i32_0 : i32, i32
  }
  func.func @transform_3(%arg0: i32) -> (i32, i32) {
    %c0_i32 = arith.constant 0 : i32
    %c0_i32_0 = arith.constant 0 : i32
    %c0_i32_1 = arith.constant 0 : i32
    return %c0_i32, %c0_i32_0 : i32, i32
  }
  func.func @transform_4(%arg0: i32) -> (i32, i32) {
    %c0_i32 = arith.constant 0 : i32
    %c0_i32_0 = arith.constant 0 : i32
    %c0_i32_1 = arith.constant 0 : i32
    return %c0_i32, %c0_i32_0 : i32, i32
  }
  func.func @transform_5(%arg0: i32) -> (i32, i32) {
    %c0_i32 = arith.constant 0 : i32
    %c0_i32_0 = arith.constant 0 : i32
    return %arg0, %c0_i32 : i32, i32
  }
}

</mosaic_0001>

<llo_original>
// kernel: tpu_custom_call.1
$region0: #{tpu_custom_call.1}
  #allocation0 [shape = 'u32[]', space=smem, size = 0x4, offset = 0x4, fixed_abs, tag = 'smem constant byte address 0x4 - core index']
  #allocation1 [shape = 'u32[144,128]{1,0:T(1,128)}', space=vmem, size = 0x12000, scoped, tag = 'internal scratch']
  %s0 = inlined_call_operand.vmem [shape: f32[10,256], index: 0, kind: input, shape index: {}]
  %s1 = inlined_call_operand.vmem [shape: f32[10,128], index: 1, kind: input, shape index: {}]
  %s2 = inlined_call_operand.vmem [shape: f32[128,8], index: 2, kind: input, shape index: {}]
  %s3 = inlined_call_operand.vmem [shape: f32[8,256], index: 3, kind: input, shape index: {}]
  %s4 = inlined_call_operand.vmem [shape: f32[256,32], index: 4, kind: input, shape index: {}]
  %s5 = inlined_call_operand.hbm [shape: f32[10,32], index: 5, kind: output, shape index: {}]
  %s6 = sld [smem:[#allocation0]]
  $region53: #{tpu_custom_call.1} parent=0
    _
  %s8 = ssub.s32 1, %s6
  %s9 = scalar_select 0, %s8, %s6
  $region1: #{tpu_custom_call.1} parent=0
    #allocation2 [shape = 'u8[8192]{0}', space=vmem, size = 0x2000, scoped, tag = 'output window, operand 0']
    #allocation3 [shape = 's32[2]{0}', space=sflag, size = 0x8, scoped, tag = 'scoped memory for tpu_custom_call.1']
    %10 = vsyncpa [#allocation3], 0
    %s11 = scalar_lea.sflag [#allocation3], 1
    %12 = vsyncpa %s11, 0
    loop: start=0, step=1, limit=4
    $region2: #{tpu_custom_call.1} parent=1 // loop_pre_header
      _
    $region3: #{tpu_custom_call.1} parent=1 // loop_header
      %s14 = sphi 0, %s18
      %p15 = scmp.ge.s32.totalorder %s14, 4
      %s24 = sphi 0, %s26
      %s27 = sphi 0, %s24
      %s28 = sphi 0, %s27
      %s44 = sphi 0, %s28
      %s50 = sphi 0, %s52
      %s53 = sphi 0, %s50
      %s54 = sphi 0, %s53
      %s70 = sphi 0, %s54
      %s74 = sphi 0, %s74
      %s76 = sphi 0, %s74
      %s77 = sphi 0, %s76
      %s91 = sphi 0, %s77
      %s95 = sphi 0, %s95
      %s97 = sphi 0, %s95
      %s98 = sphi 0, %s97
      %s112 = sphi 0, %s98
      %s116 = sphi 0, %s116
      %s118 = sphi 0, %s116
      %s119 = sphi 0, %s118
      %s133 = sphi 0, %s119
      %s139 = sphi 0, %s141
      %s142 = sphi 0, %s139
      %s143 = sphi 0, %s142
      %s159 = sphi 0, %s143
    $region4: #{tpu_custom_call.1} parent=1 // loop_header_branch
      %17 = sbr.rel (%p15) target = $region8
    $region5: #{tpu_custom_call.1} parent=1 // loop_body
      %s19 = ssub.s32 %s14, 1
      %s20 = ssub.s32 %s14, 2
      %s21 = sadd.s32 %s14, 1
      %s22 = ssub.s32 %s14, %s21
      %p23 = scmp.eq.s32.totalorder %s22, 0
      %s25 = sadd.s32 %s24, 1
      %s26 = scalar_select %p23, %s24, %s25
      %p29 = pneg %p23
      %p30 = scmp.eq.s32.totalorder %s14, 1
      %p31 = por %p29, %p30
      %p32 = scmp.ne.s32.totalorder %s24, %s27
      %p33 = scmp.eq.s32.totalorder %s14, 0
      %p34 = por %p32, %p33
      %p35 = scmp.ne.s32.totalorder %s24, %s27
      %p36 = scmp.eq.s32.totalorder %s19, 1
      %p37 = por %p35, %p36
      %p38 = scmp.ne.s32.totalorder %s27, %s28
      %p39 = scmp.eq.s32.totalorder %s19, 0
      %p40 = por %p38, %p39
      %p41 = scmp.ne.s32.totalorder %s27, %s28
      %p42 = scmp.eq.s32.totalorder %s20, 1
      %p43 = por %p41, %p42
      %p45 = scmp.ne.s32.totalorder %s28, %s44
      %p46 = scmp.eq.s32.totalorder %s20, 0
      %p47 = por %p45, %p46
      %s48 = ssub.s32 %s14, %s21
      %p49 = scmp.eq.s32.totalorder %s48, 0
      %s51 = sadd.s32 %s50, 1
      %s52 = scalar_select %p49, %s50, %s51
      %p55 = pneg %p49
      %p56 = scmp.eq.s32.totalorder %s14, 1
      %p57 = por %p55, %p56
      %p58 = scmp.ne.s32.totalorder %s50, %s53
      %p59 = scmp.eq.s32.totalorder %s14, 0
      %p60 = por %p58, %p59
      %p61 = scmp.ne.s32.totalorder %s50, %s53
      %p62 = scmp.eq.s32.totalorder %s19, 1
      %p63 = por %p61, %p62
      %p64 = scmp.ne.s32.totalorder %s53, %s54
      %p65 = scmp.eq.s32.totalorder %s19, 0
      %p66 = por %p64, %p65
      %p67 = scmp.ne.s32.totalorder %s53, %s54
      %p68 = scmp.eq.s32.totalorder %s20, 1
      %p69 = por %p67, %p68
      %p71 = scmp.ne.s32.totalorder %s54, %s70
      %p72 = scmp.eq.s32.totalorder %s20, 0
      %p73 = por %p71, %p72
      %s75 = sadd.s32 %s74, 1
      %p78 = scmp.eq.s32.totalorder %s14, 1
      %p79 = scmp.ne.s32.totalorder %s74, %s76
      %p80 = scmp.eq.s32.totalorder %s14, 0
      %p81 = por %p79, %p80
      %p82 = scmp.ne.s32.totalorder %s74, %s76
      %p83 = scmp.eq.s32.totalorder %s19, 1
      %p84 = por %p82, %p83
      %p85 = scmp.ne.s32.totalorder %s76, %s77
      %p86 = scmp.eq.s32.totalorder %s19, 0
      %p87 = por %p85, %p86
      %p88 = scmp.ne.s32.totalorder %s76, %s77
      %p89 = scmp.eq.s32.totalorder %s20, 1
      %p90 = por %p88, %p89
      %p92 = scmp.ne.s32.totalorder %s77, %s91
      %p93 = scmp.eq.s32.totalorder %s20, 0
      %p94 = por %p92, %p93
      %s96 = sadd.s32 %s95, 1
      %p99 = scmp.eq.s32.totalorder %s14, 1
      %p100 = scmp.ne.s32.totalorder %s95, %s97
      %p101 = scmp.eq.s32.totalorder %s14, 0
      %p102 = por %p100, %p101
      %p103 = scmp.ne.s32.totalorder %s95, %s97
      %p104 = scmp.eq.s32.totalorder %s19, 1
      %p105 = por %p103, %p104
      %p106 = scmp.ne.s32.totalorder %s97, %s98
      %p107 = scmp.eq.s32.totalorder %s19, 0
      %p108 = por %p106, %p107
      %p109 = scmp.ne.s32.totalorder %s97, %s98
      %p110 = scmp.eq.s32.totalorder %s20, 1
      %p111 = por %p109, %p110
      %p113 = scmp.ne.s32.totalorder %s98, %s112
      %p114 = scmp.eq.s32.totalorder %s20, 0
      %p115 = por %p113, %p114
      %s117 = sadd.s32 %s116, 1
      %p120 = scmp.eq.s32.totalorder %s14, 1
      %p121 = scmp.ne.s32.totalorder %s116, %s118
      %p122 = scmp.eq.s32.totalorder %s14, 0
      %p123 = por %p121, %p122
      %p124 = scmp.ne.s32.totalorder %s116, %s118
      %p125 = scmp.eq.s32.totalorder %s19, 1
      %p126 = por %p124, %p125
      %p127 = scmp.ne.s32.totalorder %s118, %s119
      %p128 = scmp.eq.s32.totalorder %s19, 0
      %p129 = por %p127, %p128
      %p130 = scmp.ne.s32.totalorder %s118, %s119
      %p131 = scmp.eq.s32.totalorder %s20, 1
      %p132 = por %p130, %p131
      %p134 = scmp.ne.s32.totalorder %s119, %s133
      %p135 = scmp.eq.s32.totalorder %s20, 0
      %p136 = por %p134, %p135
      %s137 = ssub.s32 %s14, %s21
      %p138 = scmp.eq.s32.totalorder %s137, 0
      %s140 = sadd.s32 %s139, 1
      %s141 = scalar_select %p138, %s139, %s140
      %p144 = pneg %p138
      %p145 = scmp.eq.s32.totalorder %s14, 1
      %p146 = por %p144, %p145
      %p147 = scmp.ne.s32.totalorder %s139, %s142
      %p148 = scmp.eq.s32.totalorder %s14, 0
      %p149 = por %p147, %p148
      %p150 = scmp.ne.s32.totalorder %s139, %s142
      %p151 = scmp.eq.s32.totalorder %s19, 1
      %p152 = por %p150, %p151
      %p153 = scmp.ne.s32.totalorder %s142, %s143
      %p154 = scmp.eq.s32.totalorder %s19, 0
      %p155 = por %p153, %p154
      %p156 = scmp.ne.s32.totalorder %s142, %s143
      %p157 = scmp.eq.s32.totalorder %s20, 1
      %p158 = por %p156, %p157
      %p160 = scmp.ne.s32.totalorder %s143, %s159
      %p161 = scmp.eq.s32.totalorder %s20, 0
      %p162 = por %p160, %p161
      %p163 = scmp.le.s32.totalorder 1, %s14
      %p164 = scmp.lt.s32.totalorder %s14, 3
      %p165 = pnand %p163, %p164
      %p166 = pneg %p165
      // Predicated region
      $region9: #{tpu_custom_call.1} parent=5 // pred_check
        _
      $region10: #{tpu_custom_call.1} parent=5 // pred_check_branch
        %168 = sbr.rel (%p165) target = $region12
      $region11: #{tpu_custom_call.1} parent=5 // pred_region
        %s169 = ssub.s32 %s14, 1
        // Predicated region
        $region13: #{tpu_custom_call.1} parent=11 // pred_check
          %p170 = pneg %p87
        $region14: #{tpu_custom_call.1} parent=11 // pred_check_branch
          %172 = sbr.rel (%p170) target = $region16
        $region15: #{tpu_custom_call.1} parent=11 // pred_region
          _
        $region16: #{tpu_custom_call.1} parent=11 // pred_fallthru
          _
        // Predicated region
        $region17: #{tpu_custom_call.1} parent=11 // pred_check
          %p173 = pneg %p108
        $region18: #{tpu_custom_call.1} parent=11 // pred_check_branch
          %175 = sbr.rel (%p173) target = $region20
        $region19: #{tpu_custom_call.1} parent=11 // pred_region
          _
        $region20: #{tpu_custom_call.1} parent=11 // pred_fallthru
          _
        // Predicated region
        $region21: #{tpu_custom_call.1} parent=11 // pred_check
          %p176 = pneg %p129
        $region22: #{tpu_custom_call.1} parent=11 // pred_check_branch
          %178 = sbr.rel (%p176) target = $region24
        $region23: #{tpu_custom_call.1} parent=11 // pred_region
          _
        $region24: #{tpu_custom_call.1} parent=11 // pred_fallthru
          _
      $region12: #{tpu_custom_call.1} parent=5 // pred_fallthru
        _
      %p179 = scmp.lt.s32.totalorder %s14, 2
      // Predicated region
      $region25: #{tpu_custom_call.1} parent=5 // pred_check
        %p180 = pneg %p179
      $region26: #{tpu_custom_call.1} parent=5 // pred_check_branch
        %182 = sbr.rel (%p180) target = $region28
      $region27: #{tpu_custom_call.1} parent=5 // pred_region
        // Predicated region
        $region29: #{tpu_custom_call.1} parent=27 // pred_check
          %p183 = pneg %p34
        $region30: #{tpu_custom_call.1} parent=27 // pred_check_branch
          %185 = sbr.rel (%p183) target = $region32
        $region31: #{tpu_custom_call.1} parent=27 // pred_region
          %p186 = scmp.lt.s32.totalorder %s14, 1
          %s187 = scalar_select %p186, %s14, 1
          %s188 = smul.addr %s187, 2
          %s189 = smul.addr %s188, 8
          %s190 = scalar_lea.vmem %s0, %s189
        $region32: #{tpu_custom_call.1} parent=27 // pred_fallthru
          _
        // Predicated region
        $region33: #{tpu_custom_call.1} parent=27 // pred_check
          %p191 = pneg %p60
        $region34: #{tpu_custom_call.1} parent=27 // pred_check_branch
          %193 = sbr.rel (%p191) target = $region36
        $region35: #{tpu_custom_call.1} parent=27 // pred_region
          %p194 = scmp.lt.s32.totalorder %s14, 1
          %s195 = scalar_select %p194, %s14, 1
          %s196 = smul.addr %s195, 8
          %s197 = scalar_lea.vmem %s1, %s196
        $region36: #{tpu_custom_call.1} parent=27 // pred_fallthru
          _
      $region28: #{tpu_custom_call.1} parent=5 // pred_fallthru
        _
      %p198 = scmp.le.s32.totalorder 1, %s14
      %p199 = scmp.lt.s32.totalorder %s14, 3
      %p200 = pnand %p198, %p199
      %p201 = pneg %p200
      // Predicated region
      $region37: #{tpu_custom_call.1} parent=5 // pred_check
        _
      $region38: #{tpu_custom_call.1} parent=5 // pred_check_branch
        %203 = sbr.rel (%p200) target = $region40
      $region39: #{tpu_custom_call.1} parent=5 // pred_region
        %s204 = ssub.s32 %s14, 1
        %p205 = scmp.lt.s32.totalorder %s19, 1
        %s206 = scalar_select %p205, %s19, 1
        %s207 = smul.addr %s206, 2
        %s208 = smul.addr %s207, 8
        %s209 = scalar_lea.vmem %s0, %s208
        %p210 = pneg %p40
        %p211 = pneg %p37
        %p212 = scmp.lt.s32.totalorder %s19, 1
        %s213 = scalar_select %p212, %s19, 1
        %s214 = smul.addr %s213, 8
        %s215 = scalar_lea.vmem %s1, %s214
        %p216 = pneg %p66
        %p217 = pneg %p63
        %p218 = pneg %p87
        %p219 = pneg %p84
        %p220 = pneg %p108
        %p221 = pneg %p105
        %p222 = pneg %p129
        %p223 = pneg %p126
        %p224 = pneg %p155
        %p225 = pneg %p152
        %s226 = sand.u32 %s142, 1
        %s227 = scalar_lea.sflag [#allocation3], %s226
        %s228 = sand.u32 %s142, 1
        %s229 = smul.addr %s228, 8
        %s230 = scalar_lea.vmem [#allocation2], %s229
        %p231 = scmp.lt.s32.totalorder %s19, 1
        %s232 = scalar_select %p231, %s19, 1
        %s233 = smul.addr %s232, 2
        %s234 = smul.addr %s233, 8
        %s235 = scalar_lea.vmem %s0, %s234
        %p236 = scmp.lt.s32.totalorder %s19, 1
        %s237 = scalar_select %p236, %s19, 1
        %s238 = smul.addr %s237, 8
        %s239 = scalar_lea.vmem %s1, %s238
        %v240 = vld [vmem:[%s239] sm:$0xff]
        %v241 = vld [vmem:[%s2] sm:$0xff]
        %v242 = vld [vmem:[%s2 + $0x8] sm:$0xff]
        %v243 = vld [vmem:[%s2 + $0x10] sm:$0xff]
        %v244 = vld [vmem:[%s2 + $0x18] sm:$0xff]
        %v245 = vld [vmem:[%s2 + $0x20] sm:$0xff]
        %v246 = vld [vmem:[%s2 + $0x28] sm:$0xff]
        %v247 = vld [vmem:[%s2 + $0x30] sm:$0xff]
        %v248 = vld [vmem:[%s2 + $0x38] sm:$0xff]
        %v249 = vld [vmem:[%s2 + $0x40] sm:$0xff]
        %v250 = vld [vmem:[%s2 + $0x48] sm:$0xff]
        %v251 = vld [vmem:[%s2 + $0x50] sm:$0xff]
        %v252 = vld [vmem:[%s2 + $0x58] sm:$0xff]
        %v253 = vld [vmem:[%s2 + $0x60] sm:$0xff]
        %v254 = vld [vmem:[%s2 + $0x68] sm:$0xff]
        %v255 = vld [vmem:[%s2 + $0x70] sm:$0xff]
        %v256 = vld [vmem:[%s2 + $0x78] sm:$0xff]
        %257 = vmatprep.subr.mxu0 0.0
        %258 = vmatpush1.msra.mxu0 %v256
        %259 = vmatprep.subr.mxu0 0.0
        %260 = vmatpush1.msra.mxu0 %v255
        %261 = vmatprep.subr.mxu0 0.0
        %262 = vmatpush1.msra.mxu0 %v254
        %263 = vmatprep.subr.mxu0 0.0
        %264 = vmatpush1.msra.mxu0 %v253
        %265 = vmatprep.subr.mxu0 0.0
        %266 = vmatpush1.msra.mxu0 %v252
        %267 = vmatprep.subr.mxu0 0.0
        %268 = vmatpush1.msra.mxu0 %v251
        %269 = vmatprep.subr.mxu0 0.0
        %270 = vmatpush1.msra.mxu0 %v250
        %271 = vmatprep.subr.mxu0 0.0
        %272 = vmatpush1.msra.mxu0 %v249
        %273 = vmatprep.subr.mxu0 0.0
        %274 = vmatpush1.msra.mxu0 %v248
        %275 = vmatprep.subr.mxu0 0.0
        %276 = vmatpush1.msra.mxu0 %v247
        %277 = vmatprep.subr.mxu0 0.0
        %278 = vmatpush1.msra.mxu0 %v246
        %279 = vmatprep.subr.mxu0 0.0
        %280 = vmatpush1.msra.mxu0 %v245
        %281 = vmatprep.subr.mxu0 0.0
        %282 = vmatpush1.msra.mxu0 %v244
        %283 = vmatprep.subr.mxu0 0.0
        %284 = vmatpush1.msra.mxu0 %v243
        %285 = vmatprep.subr.mxu0 0.0
        %286 = vmatpush1.msra.mxu0 %v242
        %287 = vmatprep.subr.mxu0 0.0
        %288 = vmatpush1.msra.mxu0 %v241
        %289 = vmatprep.subr.mxu0 0.0
        %290 = vmatpush2.msra.mxu0 0.0
        %291 = vmatprep.subr.mxu0 0.0
        %292 = vmatpush2.msra.mxu0 0.0
        %293 = vmatprep.subr.mxu0 0.0
        %294 = vmatpush2.msra.mxu0 0.0
        %295 = vmatprep.subr.mxu0 0.0
        %296 = vmatpush2.msra.mxu0 0.0
        %297 = vmatprep.subr.mxu0 0.0
        %298 = vmatpush2.msra.mxu0 0.0
        %299 = vmatprep.subr.mxu0 0.0
        %300 = vmatpush2.msra.mxu0 0.0
        %301 = vmatprep.subr.mxu0 0.0
        %302 = vmatpush2.msra.mxu0 0.0
        %303 = vmatprep.subr.mxu0 0.0
        %304 = vmatpush2.msra.mxu0 0.0
        %305 = vmatprep.subr.mxu0 0.0
        %306 = vmatpush2.msra.mxu0 0.0
        %307 = vmatprep.subr.mxu0 0.0
        %308 = vmatpush2.msra.mxu0 0.0
        %309 = vmatprep.subr.mxu0 0.0
        %310 = vmatpush2.msra.mxu0 0.0
        %311 = vmatprep.subr.mxu0 0.0
        %312 = vmatpush2.msra.mxu0 0.0
        %313 = vmatprep.subr.mxu0 0.0
        %314 = vmatpush2.msra.mxu0 0.0
        %315 = vmatprep.subr.mxu0 0.0
        %316 = vmatpush2.msra.mxu0 0.0
        %317 = vmatprep.subr.mxu0 0.0
        %318 = vmatpush2.msra.mxu0 0.0
        %319 = vmatprep.subr.mxu0 0.0
        %320 = vmatpush2.msra.mxu0 0.0
        %321 = vmatprep.mubr.f32.mxu0 0.0
        %322 = vmatmul.mubr.f32.gmra.mxu0 %v240
        %v323 = vpop.f32.mrf.mxu0
        %v324 = vadd.f32 0.0, %v323
        %v325 = vpop.f32.mrf.mxu0
        %326 = vdwg.mxu0
        %v327 = vtanh.pop %v324
        %v328 = vmul.f32 %v327, 1.442695
        %v329 = vpow.pop %v328
        %vm330 = vcmask 64512
        %v331 = vsel %vm330, %v329, 0.0
        %332 = vadd.xlane.f32.xlu0 %v331
        %v333 = vpop.xlane.xlu0 %332
        %v334 = vld [vmem:[%s3] sm:$0xff]
        %v335 = vld [vmem:[%s3 + $0x8] sm:$0xff]
        %v337 = vsel %vm330, %v329, 0
        %339 = vmatprep.subr.mxu0 0.0
        %340 = vmatpush1.msra.mxu0 0.0
        %341 = vmatprep.subr.mxu0 0.0
        %342 = vmatpush1.msra.mxu0 0.0
        %343 = vmatprep.subr.mxu0 0.0
        %344 = vmatpush1.msra.mxu0 0.0
        %345 = vmatprep.subr.mxu0 0.0
        %346 = vmatpush1.msra.mxu0 0.0
        %347 = vmatprep.subr.mxu0 0.0
        %348 = vmatpush1.msra.mxu0 0.0
        %349 = vmatprep.subr.mxu0 0.0
        %350 = vmatpush1.msra.mxu0 0.0
        %351 = vmatprep.subr.mxu0 0.0
        %352 = vmatpush1.msra.mxu0 0.0
        %353 = vmatprep.subr.mxu0 0.0
        %354 = vmatpush1.msra.mxu0 0.0
        %355 = vmatprep.subr.mxu0 0.0
        %356 = vmatpush1.msra.mxu0 0.0
        %357 = vmatprep.subr.mxu0 0.0
        %358 = vmatpush1.msra.mxu0 0.0
        %359 = vmatprep.subr.mxu0 0.0
        %360 = vmatpush1.msra.mxu0 0.0
        %361 = vmatprep.subr.mxu0 0.0
        %362 = vmatpush1.msra.mxu0 0.0
        %363 = vmatprep.subr.mxu0 0.0
        %364 = vmatpush1.msra.mxu0 0.0
        %365 = vmatprep.subr.mxu0 0.0
        %366 = vmatpush1.msra.mxu0 0.0
        %367 = vmatprep.subr.mxu0 0.0
        %368 = vmatpush1.msra.mxu0 0.0
        %369 = vmatprep.subr.mxu0 %v335
        %370 = vmatpush1.msra.mxu0 %v334
        %371 = vmatprep.subr.mxu0 0.0
        %372 = vmatpush2.msra.mxu0 0.0
        %373 = vmatprep.subr.mxu0 0.0
        %374 = vmatpush2.msra.mxu0 0.0
        %375 = vmatprep.subr.mxu0 0.0
        %376 = vmatpush2.msra.mxu0 0.0
        %377 = vmatprep.subr.mxu0 0.0
        %378 = vmatpush2.msra.mxu0 0.0
        %379 = vmatprep.subr.mxu0 0.0
        %380 = vmatpush2.msra.mxu0 0.0
        %381 = vmatprep.subr.mxu0 0.0
        %382 = vmatpush2.msra.mxu0 0.0
        %383 = vmatprep.subr.mxu0 0.0
        %384 = vmatpush2.msra.mxu0 0.0
        %385 = vmatprep.subr.mxu0 0.0
        %386 = vmatpush2.msra.mxu0 0.0
        %387 = vmatprep.subr.mxu0 0.0
        %388 = vmatpush2.msra.mxu0 0.0
        %389 = vmatprep.subr.mxu0 0.0
        %390 = vmatpush2.msra.mxu0 0.0
        %391 = vmatprep.subr.mxu0 0.0
        %392 = vmatpush2.msra.mxu0 0.0
        %393 = vmatprep.subr.mxu0 0.0
        %394 = vmatpush2.msra.mxu0 0.0
        %395 = vmatprep.subr.mxu0 0.0
        %396 = vmatpush2.msra.mxu0 0.0
        %397 = vmatprep.subr.mxu0 0.0
        %398 = vmatpush2.msra.mxu0 0.0
        %399 = vmatprep.subr.mxu0 0.0
        %400 = vmatpush2.msra.mxu0 0.0
        %401 = vmatprep.subr.mxu0 0.0
        %402 = vmatpush2.msra.mxu0 0.0
        %403 = vmatprep.mubr.f32.mxu0 0.0
        %404 = vmatmul.mubr.f32.gmra.mxu0 %v337
        %v405 = vpop.f32.mrf.mxu0
        %v406 = vadd.f32 0.0, %v405
        %v407 = vpop.f32.mrf.mxu0
        %v408 = vadd.f32 0.0, %v407
        %409 = vdwg.mxu0
        %v410 = vld [vmem:[%s235] sm:$0xff]
        %v411 = vld [vmem:[%s235 + $0x8] sm:$0xff]
        %v412 = vmul.f32 %v406, %v410
        %v413 = vmul.f32 %v408, %v411
        %v414 = vld [vmem:[%s4] sm:$0xff]
        %v415 = vld [vmem:[%s4 + $0x8] sm:$0xff]
        %v416 = vld [vmem:[%s4 + $0x10] sm:$0xff]
        %v417 = vld [vmem:[%s4 + $0x18] sm:$0xff]
        %v418 = vld [vmem:[%s4 + $0x20] sm:$0xff]
        %v419 = vld [vmem:[%s4 + $0x28] sm:$0xff]
        %v420 = vld [vmem:[%s4 + $0x30] sm:$0xff]
        %v421 = vld [vmem:[%s4 + $0x38] sm:$0xff]
        %v422 = vld [vmem:[%s4 + $0x40] sm:$0xff]
        %v423 = vld [vmem:[%s4 + $0x48] sm:$0xff]
        %v424 = vld [vmem:[%s4 + $0x50] sm:$0xff]
        %v425 = vld [vmem:[%s4 + $0x58] sm:$0xff]
        %v426 = vld [vmem:[%s4 + $0x60] sm:$0xff]
        %v427 = vld [vmem:[%s4 + $0x68] sm:$0xff]
        %v428 = vld [vmem:[%s4 + $0x70] sm:$0xff]
        %v429 = vld [vmem:[%s4 + $0x78] sm:$0xff]
        %v430 = vld [vmem:[%s4 + $0x80] sm:$0xff]
        %v431 = vld [vmem:[%s4 + $0x88] sm:$0xff]
        %v432 = vld [vmem:[%s4 + $0x90] sm:$0xff]
        %v433 = vld [vmem:[%s4 + $0x98] sm:$0xff]
        %v434 = vld [vmem:[%s4 + $0xa0] sm:$0xff]
        %v435 = vld [vmem:[%s4 + $0xa8] sm:$0xff]
        %v436 = vld [vmem:[%s4 + $0xb0] sm:$0xff]
        %v437 = vld [vmem:[%s4 + $0xb8] sm:$0xff]
        %v438 = vld [vmem:[%s4 + $0xc0] sm:$0xff]
        %v439 = vld [vmem:[%s4 + $0xc8] sm:$0xff]
        %v440 = vld [vmem:[%s4 + $0xd0] sm:$0xff]
        %v441 = vld [vmem:[%s4 + $0xd8] sm:$0xff]
        %v442 = vld [vmem:[%s4 + $0xe0] sm:$0xff]
        %v443 = vld [vmem:[%s4 + $0xe8] sm:$0xff]
        %v444 = vld [vmem:[%s4 + $0xf0] sm:$0xff]
        %v445 = vld [vmem:[%s4 + $0xf8] sm:$0xff]
        %446 = vmatprep.subr.mxu0 0.0
        %447 = vmatpush1.msra.mxu0 %v429
        %448 = vmatprep.subr.mxu0 0.0
        %449 = vmatpush1.msra.mxu0 %v428
        %450 = vmatprep.subr.mxu0 0.0
        %451 = vmatpush1.msra.mxu0 %v427
        %452 = vmatprep.subr.mxu0 0.0
        %453 = vmatpush1.msra.mxu0 %v426
        %454 = vmatprep.subr.mxu0 0.0
        %455 = vmatpush1.msra.mxu0 %v425
        %456 = vmatprep.subr.mxu0 0.0
        %457 = vmatpush1.msra.mxu0 %v424
        %458 = vmatprep.subr.mxu0 0.0
        %459 = vmatpush1.msra.mxu0 %v423
        %460 = vmatprep.subr.mxu0 0.0
        %461 = vmatpush1.msra.mxu0 %v422
        %462 = vmatprep.subr.mxu0 0.0
        %463 = vmatpush1.msra.mxu0 %v421
        %464 = vmatprep.subr.mxu0 0.0
        %465 = vmatpush1.msra.mxu0 %v420
        %466 = vmatprep.subr.mxu0 0.0
        %467 = vmatpush1.msra.mxu0 %v419
        %468 = vmatprep.subr.mxu0 0.0
        %469 = vmatpush1.msra.mxu0 %v418
        %470 = vmatprep.subr.mxu0 0.0
        %471 = vmatpush1.msra.mxu0 %v417
        %472 = vmatprep.subr.mxu0 0.0
        %473 = vmatpush1.msra.mxu0 %v416
        %474 = vmatprep.subr.mxu0 0.0
        %475 = vmatpush1.msra.mxu0 %v415
        %476 = vmatprep.subr.mxu0 0.0
        %477 = vmatpush1.msra.mxu0 %v414
        %478 = vmatprep.subr.mxu0 0.0
        %479 = vmatpush2.msra.mxu0 %v445
        %480 = vmatprep.subr.mxu0 0.0
        %481 = vmatpush2.msra.mxu0 %v444
        %482 = vmatprep.subr.mxu0 0.0
        %483 = vmatpush2.msra.mxu0 %v443
        %484 = vmatprep.subr.mxu0 0.0
        %485 = vmatpush2.msra.mxu0 %v442
        %486 = vmatprep.subr.mxu0 0.0
        %487 = vmatpush2.msra.mxu0 %v441
        %488 = vmatprep.subr.mxu0 0.0
        %489 = vmatpush2.msra.mxu0 %v440
        %490 = vmatprep.subr.mxu0 0.0
        %491 = vmatpush2.msra.mxu0 %v439
        %492 = vmatprep.subr.mxu0 0.0
        %493 = vmatpush2.msra.mxu0 %v438
        %494 = vmatprep.subr.mxu0 0.0
        %495 = vmatpush2.msra.mxu0 %v437
        %496 = vmatprep.subr.mxu0 0.0
        %497 = vmatpush2.msra.mxu0 %v436
        %498 = vmatprep.subr.mxu0 0.0
        %499 = vmatpush2.msra.mxu0 %v435
        %500 = vmatprep.subr.mxu0 0.0
        %501 = vmatpush2.msra.mxu0 %v434
        %502 = vmatprep.subr.mxu0 0.0
        %503 = vmatpush2.msra.mxu0 %v433
        %504 = vmatprep.subr.mxu0 0.0
        %505 = vmatpush2.msra.mxu0 %v432
        %506 = vmatprep.subr.mxu0 0.0
        %507 = vmatpush2.msra.mxu0 %v431
        %508 = vmatprep.subr.mxu0 0.0
        %509 = vmatpush2.msra.mxu0 %v430
        %510 = vmatprep.mubr.f32.mxu0 %v413
        %511 = vmatmul.mubr.f32.gmra.mxu0 %v412
        %v512 = vpop.f32.mrf.mxu0
        %v513 = vadd.f32 0.0, %v512
        %v514 = vpop.f32.mrf.mxu0
        %515 = vdwg.mxu0
        %v516 = vrcp.pop %v333
        %v517 = vmul.f32 %v513, %v516
        %vm518 = vcmask 261120
        %519 = vst.msk [vmem:[%s230] sm:$0xff] %vm518, %v517
        %s520 = sand.u32 %s142, 1
        %s521 = scalar_lea.sflag [#allocation3], %s520
        %s522 = sand.u32 %s142, 1
        %s523 = smul.addr %s522, 8
        %s524 = scalar_lea.vmem [#allocation2], %s523
        // Predicated region
        $region41: #{tpu_custom_call.1} parent=39 // pred_check
          %p525 = pneg %p152
        $region42: #{tpu_custom_call.1} parent=39 // pred_check_branch
          %527 = sbr.rel (%p525) target = $region44
        $region43: #{tpu_custom_call.1} parent=39 // pred_region
          %s529 = ssub.s32 128, 128
          %530 = vsyncadd %s521, %s529
          %s531 = smul.addr %s19, 128
          %s532 = scalar_lea.hbm %s5, %s531
          %s534 = sshll.u32 %s524, 4
          %s535 = int_to_ptr.vmem [resolvable:$true] %s534
          %537 = dma.vmem_to_hbm [thread:$0]  %s535, 128, %s532, %s521
        $region44: #{tpu_custom_call.1} parent=39 // pred_fallthru
          _
      $region40: #{tpu_custom_call.1} parent=5 // pred_fallthru
        _
      %p538 = scmp.le.s32.totalorder 2, %s14
      // Predicated region
      $region45: #{tpu_custom_call.1} parent=5 // pred_check
        %p539 = pneg %p538
      $region46: #{tpu_custom_call.1} parent=5 // pred_check_branch
        %541 = sbr.rel (%p539) target = $region48
      $region47: #{tpu_custom_call.1} parent=5 // pred_region
        %s542 = ssub.s32 %s14, 2
        // Predicated region
        $region49: #{tpu_custom_call.1} parent=47 // pred_check
          %p543 = pneg %p158
        $region50: #{tpu_custom_call.1} parent=47 // pred_check_branch
          %545 = sbr.rel (%p543) target = $region52
        $region51: #{tpu_custom_call.1} parent=47 // pred_region
          %s546 = sand.u32 %s143, 1
          %s547 = scalar_lea.sflag [#allocation3], %s546
          %s548 = sand.u32 %s143, 1
          %s549 = smul.addr %s548, 8
          %s550 = scalar_lea.vmem [#allocation2], %s549
          %551 = dma.done %s547, 128
        $region52: #{tpu_custom_call.1} parent=47 // pred_fallthru
          _
      $region48: #{tpu_custom_call.1} parent=5 // pred_fallthru
        _
    $region6: #{tpu_custom_call.1} parent=1 // loop_footer
      %s18 = sadd.s32 1, %s14
    $region7: #{tpu_custom_call.1} parent=1 // loop_footer_branch
      %13 = sbr.rel target = $region3
    $region8: #{tpu_custom_call.1} parent=1 // loop_exit
      _
    %552 = vsyncpa [#allocation3], 1
    %s553 = scalar_lea.sflag [#allocation3], 1
    %554 = vsyncpa %s553, 1

</llo_original>
